<compile_context>
chip_gen: v7x
topology: tpu7x:2x2x1
jax: 0.10.0
libtpu: 0.0.40
codegen_flags: <defaults>
</compile_context>

<pallas_src>
import math

import jax
import jax.numpy as jnp
from jax import lax
from jax.experimental import pallas as pl
from jax.experimental.pallas import tpu as pltpu


# ------------------------------ helpers -------------------------------------

_MAX_BB = 2048   # 2048-row tile: ~1 MB per f32 block (128-lane padded);
                 # 7 blocks x 2 buffers ≈ 14 MB, comfortably under the 32 MiB limit.


def _round_up8(n):
    return ((n + 7) // 8) * 8


def _pick_block_b(B):
    """Row tile for the batch axis.

    - multiple of 8 (sublane aligned) whenever it is smaller than B,
    - capped at _MAX_BB so a huge batch never produces one giant block,
    - sized for >= 4 grid steps when possible so the "parallel" batch axis can
      shard across TensorCores (v7x has 2 TCs) and still pipeline.
    Tiny batches (<= 8 rows) use a single full block (block dim == array dim).
    """
    if B <= 8:
        return B
    target = _round_up8(-(-B // 4))          # ceil(B/4), rounded up to 8
    return max(8, min(_MAX_BB, target))


def _row_map(i):            # tiled over the batch (sublane) axis
    return (i, 0)


def _rep_map(i):            # weights: same block every grid step (stay resident)
    return (0, 0)


_COMPILER_PARAMS = pltpu.CompilerParams(
    dimension_semantics=("parallel",),
    vmem_limit_bytes=32 * 1024 * 1024,   # safe on v5e/v6e/v7x scoped budgets
)


# ----------------------------- Pallas kernels ------------------------------

def rnn_update_kernel(other_ref, feat_ref, hid_ref, td_ref,
                      w_o_ref, w_f_ref, w_h_ref, wt_ref, b_ref, out_ref):
    """tanh RNNCell update + row-wise L2 normalization (no wrapper concat).

    other_ref : [bb, D]   other embedding (input to W_ih's embedding rows)
    feat_ref  : [bb, F]
    hid_ref   : [bb, D]   hidden state
    td_ref    : [bb, 1]
    w_*_ref   : per-operand blocks of [W_ih^T ; W_hh^T]
    wt_ref    : [1, D]    timediff row of W_ih (applied on the VPU)
    b_ref     : [1, D]    b_ih + b_hh folded
    """
    pre = (jnp.dot(other_ref[...], w_o_ref[...], preferred_element_type=jnp.float32)
           + jnp.dot(feat_ref[...], w_f_ref[...], preferred_element_type=jnp.float32)
           + jnp.dot(hid_ref[...], w_h_ref[...], preferred_element_type=jnp.float32)
           + td_ref[...] * wt_ref[...]          # VPU broadcast, not a K=1 matmul
           + b_ref[...])
    h_new = jnp.tanh(pre)                       # [bb, D]
    ss = jnp.sum(h_new * h_new, axis=1, keepdims=True)
    inv = lax.rsqrt(jnp.maximum(ss, 1e-24))     # == 1/max(||x||, 1e-12)
    out_ref[...] = h_new * inv


def project_kernel(emb_ref, td_ref, we_ref, be1_ref, out_ref):
    """context_convert: emb * (1 + Linear(td)); '+1' folded into be1. MXU-free."""
    out_ref[...] = emb_ref[...] * (td_ref[...] * we_ref[...] + be1_ref[...])


def make_fused_kernel(D):
    """All three selects in one kernel; one fused pre-activation per grid step.

    u_ref/it_ref : [bb, D]  user / item embeddings
    f_ref        : [bb, F]  features
    td_ref       : [bb, 1]
    wu/wi/wf     : per-operand blocks of the block-diagonalized item/user RNNs
                   ([D,2D] / [D,2D] / [F,2D]); output cols = [item | user]
    wt/b         : [1, 2D]  timediff rows / folded biases
    we/be1       : [1, D]   NormalLinear(1, D) with '+1' folded into be1
    outputs      : three separate [bb, D] refs (item_update, user_update, project)
    """
    def fused_kernel(u_ref, it_ref, f_ref, td_ref,
                     wu_ref, wi_ref, wf_ref, wt_ref, b_ref, we_ref, be1_ref,
                     item_out_ref, user_out_ref, proj_out_ref):
        td = td_ref[...]
        u = u_ref[...]

        pre = (jnp.dot(u, wu_ref[...], preferred_element_type=jnp.float32)
               + jnp.dot(it_ref[...], wi_ref[...], preferred_element_type=jnp.float32)
               + jnp.dot(f_ref[...], wf_ref[...], preferred_element_type=jnp.float32)
               + td * wt_ref[...]
               + b_ref[...])
        h = jnp.tanh(pre)                                    # [bb, 2D]

        h_item = h[:, :D]
        h_user = h[:, D:]
        inv_item = lax.rsqrt(jnp.maximum(
            jnp.sum(h_item * h_item, axis=1, keepdims=True), 1e-24))
        inv_user = lax.rsqrt(jnp.maximum(
            jnp.sum(h_user * h_user, axis=1, keepdims=True), 1e-24))

        item_out_ref[...] = h_item * inv_item
        user_out_ref[...] = h_user * inv_user
        proj_out_ref[...] = u * (td * we_ref[...] + be1_ref[...])

    return fused_kernel


# ------------------------------ JAX wrappers --------------------------------

def _rnn_update_call(other_emb, feats, hidden, td, p):
    B, D = other_emb.shape
    F = feats.shape[1]
    bb = _pick_block_b(B)
    return pl.pallas_call(
        rnn_update_kernel,
        out_shape=jax.ShapeDtypeStruct((B, D), jnp.float32),
        grid=(pl.cdiv(B, bb),),
        in_specs=[pl.BlockSpec((bb, D), _row_map),
                  pl.BlockSpec((bb, F), _row_map),
                  pl.BlockSpec((bb, D), _row_map),
                  pl.BlockSpec((bb, 1), _row_map),
                  pl.BlockSpec((D, D), _rep_map),
                  pl.BlockSpec((F, D), _rep_map),
                  pl.BlockSpec((D, D), _rep_map),
                  pl.BlockSpec((1, D), _rep_map),
                  pl.BlockSpec((1, D), _rep_map)],
        out_specs=pl.BlockSpec((bb, D), _row_map),
        compiler_params=_COMPILER_PARAMS,
    )(other_emb, feats, hidden, td,
      p["w_u"], p["w_f"], p["w_hh"], p["w_t"], p["bias"])


@jax.jit
def _rnn_update(other_emb, timediffs, features, hidden, params):
    return _rnn_update_call(other_emb, features, hidden, timediffs, params)


def _project_call(emb, td, we, be1):
    B, D = emb.shape
    bb = _pick_block_b(B)
    return pl.pallas_call(
        project_kernel,
        out_shape=jax.ShapeDtypeStruct((B, D), jnp.float32),
        grid=(pl.cdiv(B, bb),),
        in_specs=[pl.BlockSpec((bb, D), _row_map),
                  pl.BlockSpec((bb, 1), _row_map),
                  pl.BlockSpec((1, D), _rep_map),
                  pl.BlockSpec((1, D), _rep_map)],
        out_specs=pl.BlockSpec((bb, D), _row_map),
        compiler_params=_COMPILER_PARAMS,
    )(emb, td, we, be1)


@jax.jit
def _project(embeddings, timediffs, params):
    return _project_call(embeddings, timediffs, params["w_emb"], params["b_emb1"])


@jax.jit
def _forward_all(user_emb, item_emb, timediffs, features, fp):
    """Single fused pallas_call -> (item_update, user_update, project)."""
    B, D = user_emb.shape
    F = features.shape[1]
    bb = _pick_block_b(B)
    return pl.pallas_call(
        make_fused_kernel(D),
        out_shape=(jax.ShapeDtypeStruct((B, D), jnp.float32),
                   jax.ShapeDtypeStruct((B, D), jnp.float32),
                   jax.ShapeDtypeStruct((B, D), jnp.float32)),
        grid=(pl.cdiv(B, bb),),
        in_specs=[pl.BlockSpec((bb, D), _row_map),       # user_emb
                  pl.BlockSpec((bb, D), _row_map),       # item_emb
                  pl.BlockSpec((bb, F), _row_map),       # features
                  pl.BlockSpec((bb, 1), _row_map),       # timediffs
                  pl.BlockSpec((D, 2 * D), _rep_map),    # w_u_blk
                  pl.BlockSpec((D, 2 * D), _rep_map),    # w_i_blk
                  pl.BlockSpec((F, 2 * D), _rep_map),    # w_f_blk
                  pl.BlockSpec((1, 2 * D), _rep_map),    # wt_big
                  pl.BlockSpec((1, 2 * D), _rep_map),    # b_big
                  pl.BlockSpec((1, D), _rep_map),        # w_emb
                  pl.BlockSpec((1, D), _rep_map)],       # b_emb1
        out_specs=[pl.BlockSpec((bb, D), _row_map),
                   pl.BlockSpec((bb, D), _row_map),
                   pl.BlockSpec((bb, D), _row_map)],
        compiler_params=_COMPILER_PARAMS,
    )(user_emb, item_emb, features, timediffs,
      fp["w_u_blk"], fp["w_i_blk"], fp["w_f_blk"], fp["wt_big"], fp["b_big"],
      fp["w_emb"], fp["b_emb1"])


# --------------------------------- model ------------------------------------

class JodiePallas:
    """Pallas implementation of JODIE.forward (the three `select` branches)."""

    def __init__(self, embedding_dim, num_features, key):
        D = embedding_dim
        F = num_features
        self.embedding_dim = D
        self.num_features = F
        in_size = D + 1 + F  # rnn_input_size

        ks = jax.random.split(key, 10)
        stdv = 1.0 / math.sqrt(D)

        def uni(k, shape):
            return jax.random.uniform(k, shape, jnp.float32, -stdv, stdv)

        def make_rnn(k0, k1, k2, k3):
            # PyTorch RNNCell: weight_ih [D, in_size] with input order
            # [other_emb | timediff | features]; stored transposed [in, out].
            w_ih_t = uni(k0, (D, in_size)).T          # [in_size, D]
            w_u = w_ih_t[:D, :]                       # [D, D]
            w_t = w_ih_t[D:D + 1, :]                  # [1, D]
            w_f = w_ih_t[D + 1:, :]                   # [F, D]
            w_hh = uni(k2, (D, D)).T                  # [D, D]
            bias = uni(k1, (1, D)) + uni(k3, (1, D))  # b_ih + b_hh folded
            return {"w_u": w_u, "w_t": w_t, "w_f": w_f, "w_hh": w_hh, "bias": bias}

        self.item_rnn = make_rnn(*ks[0:4])
        self.user_rnn = make_rnn(*ks[4:8])

        # NormalLinear(1, D): init normal(0, 1/sqrt(1) = 1)
        w_emb = jax.random.normal(ks[8], (1, D), jnp.float32)
        b_emb = jax.random.normal(ks[9], (1, D), jnp.float32)
        self._b_emb_raw = b_emb
        self.embedding_layer = {"w_emb": w_emb, "b_emb1": 1.0 + b_emb}

        # Fused block-diagonal layout, split per operand (no LHS concat):
        #   pre[:, :D]  (item branch) = u@w_item_u + it@w_item_hh + f@w_item_f
        #   pre[:, D:]  (user branch) = u@w_user_hh + it@w_user_u + f@w_user_f
        it, us = self.item_rnn, self.user_rnn
        self.fused_params = {
            "w_u_blk": jnp.concatenate([it["w_u"], us["w_hh"]], axis=1),   # [D, 2D]
            "w_i_blk": jnp.concatenate([it["w_hh"], us["w_u"]], axis=1),   # [D, 2D]
            "w_f_blk": jnp.concatenate([it["w_f"], us["w_f"]], axis=1),    # [F, 2D]
            "wt_big": jnp.concatenate([it["w_t"], us["w_t"]], axis=1),     # [1, 2D]
            "b_big": jnp.concatenate([it["bias"], us["bias"]], axis=1),    # [1, 2D]
            "w_emb": w_emb,
            "b_emb1": 1.0 + b_emb,
        }
        # TODO(synk): predict_label / predict_item_embedding heads are not part
        # of forward(); omitted here.

    def forward(self, user_embeddings, item_embeddings, timediffs=None,
                features=None, select=None):
        if select == "item_update":
            return _rnn_update(user_embeddings, timediffs, features,
                               item_embeddings, self.item_rnn)
        elif select == "user_update":
            return _rnn_update(item_embeddings, timediffs, features,
                               user_embeddings, self.user_rnn)
        elif select == "project":
            return _project(user_embeddings, timediffs, self.embedding_layer)
        raise ValueError(f"unknown select {select!r}")

    def forward_all(self, user_embeddings, item_embeddings, timediffs, features):
        """All three selects in one fused pallas_call (preferred fast path)."""
        return _forward_all(user_embeddings, item_embeddings, timediffs,
                            features, self.fused_params)


# -------------------------- reference (pure JAX) ----------------------------

def _ref_rnn_update(other_emb, td, f, h, p):
    pre = (other_emb @ p["w_u"] + td @ p["w_t"] + f @ p["w_f"]
           + h @ p["w_hh"] + p["bias"])
    h_new = jnp.tanh(pre)
    n = jnp.maximum(jnp.linalg.norm(h_new, axis=1, keepdims=True), 1e-12)
    return h_new / n


def _ref_project(emb, td, w_emb, b_emb):
    return emb * (1.0 + (td @ w_emb + b_emb))


# ---------------------------------- main -------------------------------------

if __name__ == "__main__":
    D = 32           # embedding_dim
    NF = 7           # num_features

    key = jax.random.PRNGKey(0)
    k_model, k_data = jax.random.split(key)
    model = JodiePallas(embedding_dim=D, num_features=NF, key=k_model)

    def run_case(B, kd):
        k_u, k_i, k_t, k_f = jax.random.split(kd, 4)
        user_emb = jax.random.normal(k_u, (B, D), jnp.float32)
        item_emb = jax.random.normal(k_i, (B, D), jnp.float32)
        timediffs = jax.random.normal(k_t, (B, 1), jnp.float32)
        features = jax.random.normal(k_f, (B, NF), jnp.float32)

        # per-select path (API-compatible with the PyTorch module)
        out_item = model.forward(user_emb, item_emb, timediffs, features,
                                 select="item_update")
        out_user = model.forward(user_emb, item_emb, timediffs, features,
                                 select="user_update")
        out_proj = model.forward(user_emb, item_emb, timediffs, features,
                                 select="project")

        # fused path: one pallas_call for all three selects
        f_item, f_user, f_proj = model.forward_all(user_emb, item_emb,
                                                   timediffs, features)
        jax.block_until_ready((out_item, out_user, out_proj,
                               f_item, f_user, f_proj))

        ref_item = _ref_rnn_update(user_emb, timediffs, features, item_emb,
                                   model.item_rnn)
        ref_user = _ref_rnn_update(item_emb, timediffs, features, user_emb,
                                   model.user_rnn)
        ref_proj = _ref_project(user_emb, timediffs,
                                model.embedding_layer["w_emb"], model._b_emb_raw)

        checks = [(out_item, ref_item), (out_user, ref_user), (out_proj, ref_proj),
                  (f_item, ref_item), (f_user, ref_user), (f_proj, ref_proj)]
        for got, ref in checks:
            assert got.shape == ref.shape
            assert jnp.allclose(got, ref, atol=1e-4, rtol=1e-4), \
                float(jnp.max(jnp.abs(got - ref)))

    kd1, kd2 = jax.random.split(k_data)
    run_case(8, kd1)    # single-block path
    run_case(40, kd2)   # multi-step grid with a partial tail block (bb=16, grid=3)

    print("KERNEL_OK")
</pallas_src>

<mosaic_0001>
module attributes {stable_mosaic.version = 11 : i64} {
  func.func @rnn_update_kernel(%arg0: i32, %arg1: memref<8x32xf32, #tpu.memory_space<vmem>>, %arg2: memref<8x7xf32, #tpu.memory_space<vmem>>, %arg3: memref<8x32xf32, #tpu.memory_space<vmem>>, %arg4: memref<8x1xf32, #tpu.memory_space<vmem>>, %arg5: memref<32x32xf32, #tpu.memory_space<vmem>>, %arg6: memref<7x32xf32, #tpu.memory_space<vmem>>, %arg7: memref<32x32xf32, #tpu.memory_space<vmem>>, %arg8: memref<1x32xf32, #tpu.memory_space<vmem>>, %arg9: memref<1x32xf32, #tpu.memory_space<vmem>>, %arg10: memref<8x32xf32, #tpu.memory_space<vmem>>) attributes {dimension_semantics = [#tpu.dimension_semantics<parallel>], iteration_bounds = array<i64: 1>, scalar_prefetch = 0 : i64, scratch_operands = 0 : i64, tpu.core_type = #tpu.core_type<tc>, window_params = [{transform_indices = @transform_0, window_bounds = array<i64: 8, 32>}, {transform_indices = @transform_1, window_bounds = array<i64: 8, 7>}, {transform_indices = @transform_2, window_bounds = array<i64: 8, 32>}, {transform_indices = @transform_3, window_bounds = array<i64: 8, 1>}, {pipeline_mode = #tpu.pipeline_mode<synchronous>, transform_indices = @transform_4, window_bounds = array<i64: 32, 32>}, {pipeline_mode = #tpu.pipeline_mode<synchronous>, transform_indices = @transform_5, window_bounds = array<i64: 7, 32>}, {pipeline_mode = #tpu.pipeline_mode<synchronous>, transform_indices = @transform_6, window_bounds = array<i64: 32, 32>}, {pipeline_mode = #tpu.pipeline_mode<synchronous>, transform_indices = @transform_7, window_bounds = array<i64: 1, 32>}, {pipeline_mode = #tpu.pipeline_mode<synchronous>, transform_indices = @transform_8, window_bounds = array<i64: 1, 32>}, {transform_indices = @transform_9, window_bounds = array<i64: 8, 32>}]} {
    %c0 = arith.constant 0 : index
    %c0_0 = arith.constant 0 : index
    %0 = vector.load %arg1[%c0, %c0_0] : memref<8x32xf32, #tpu.memory_space<vmem>>, vector<8x32xf32>
    %c0_1 = arith.constant 0 : index
    %c0_2 = arith.constant 0 : index
    %1 = vector.load %arg5[%c0_1, %c0_2] : memref<32x32xf32, #tpu.memory_space<vmem>>, vector<32x32xf32>
    %cst = arith.constant dense<0.000000e+00> : vector<8x32xf32>
    %2 = tpu.matmul %0, %1, %cst {dimension_numbers = #tpu.dot_dimension_numbers<[1], [0], [0], [1], [0, 0, 1, 1], [], []>} : vector<8x32xf32>, vector<32x32xf32>, vector<8x32xf32> -> vector<8x32xf32>
    %c0_3 = arith.constant 0 : index
    %c0_4 = arith.constant 0 : index
    %3 = vector.load %arg2[%c0_3, %c0_4] : memref<8x7xf32, #tpu.memory_space<vmem>>, vector<8x7xf32>
    %c0_5 = arith.constant 0 : index
    %c0_6 = arith.constant 0 : index
    %4 = vector.load %arg6[%c0_5, %c0_6] : memref<7x32xf32, #tpu.memory_space<vmem>>, vector<7x32xf32>
    %cst_7 = arith.constant dense<0.000000e+00> : vector<8x32xf32>
    %5 = tpu.matmul %3, %4, %cst_7 {dimension_numbers = #tpu.dot_dimension_numbers<[1], [0], [0], [1], [0, 0, 1, 1], [], []>} : vector<8x7xf32>, vector<7x32xf32>, vector<8x32xf32> -> vector<8x32xf32>
    %6 = arith.addf %2, %5 : vector<8x32xf32>
    %c0_8 = arith.constant 0 : index
    %c0_9 = arith.constant 0 : index
    %7 = vector.load %arg3[%c0_8, %c0_9] : memref<8x32xf32, #tpu.memory_space<vmem>>, vector<8x32xf32>
    %c0_10 = arith.constant 0 : index
    %c0_11 = arith.constant 0 : index
    %8 = vector.load %arg7[%c0_10, %c0_11] : memref<32x32xf32, #tpu.memory_space<vmem>>, vector<32x32xf32>
    %cst_12 = arith.constant dense<0.000000e+00> : vector<8x32xf32>
    %9 = tpu.matmul %7, %8, %cst_12 {dimension_numbers = #tpu.dot_dimension_numbers<[1], [0], [0], [1], [0, 0, 1, 1], [], []>} : vector<8x32xf32>, vector<32x32xf32>, vector<8x32xf32> -> vector<8x32xf32>
    %10 = arith.addf %6, %9 : vector<8x32xf32>
    %c0_13 = arith.constant 0 : index
    %c0_14 = arith.constant 0 : index
    %11 = vector.load %arg4[%c0_13, %c0_14] : memref<8x1xf32, #tpu.memory_space<vmem>>, vector<8x1xf32>
    %c0_15 = arith.constant 0 : index
    %c0_16 = arith.constant 0 : index
    %12 = vector.load %arg8[%c0_15, %c0_16] : memref<1x32xf32, #tpu.memory_space<vmem>>, vector<1x32xf32>
    %13 = vector.broadcast %11 : vector<8x1xf32> to vector<8x32xf32>
    %14 = vector.broadcast %12 : vector<1x32xf32> to vector<8x32xf32>
    %15 = arith.mulf %13, %14 : vector<8x32xf32>
    %16 = arith.addf %10, %15 : vector<8x32xf32>
    %c0_17 = arith.constant 0 : index
    %c0_18 = arith.constant 0 : index
    %17 = vector.load %arg9[%c0_17, %c0_18] : memref<1x32xf32, #tpu.memory_space<vmem>>, vector<1x32xf32>
    %18 = vector.broadcast %17 : vector<1x32xf32> to vector<8x32xf32>
    %19 = arith.addf %16, %18 : vector<8x32xf32>
    %20 = math.tanh %19 : vector<8x32xf32>
    %21 = arith.mulf %20, %20 : vector<8x32xf32>
    %cst_19 = arith.constant dense<0.000000e+00> : vector<8xf32>
    %22 = vector.multi_reduction <add>, %21, %cst_19 [1] : vector<8x32xf32> to vector<8xf32>
    %23 = vector.shape_cast %22 : vector<8xf32> to vector<8x1xf32>
    %cst_20 = arith.constant 1.000000e-24 : f32
    %24 = vector.broadcast %cst_20 : f32 to vector<8x1xf32>
    %25 = arith.maximumf %23, %24 : vector<8x1xf32>
    %26 = math.rsqrt %25 : vector<8x1xf32>
    %27 = vector.broadcast %26 : vector<8x1xf32> to vector<8x32xf32>
    %28 = arith.mulf %20, %27 : vector<8x32xf32>
    %c0_21 = arith.constant 0 : index
    %c0_22 = arith.constant 0 : index
    %29 = vector.load %arg10[%c0_21, %c0_22] : memref<8x32xf32, #tpu.memory_space<vmem>>, vector<8x32xf32>
    tpu.vector_store %arg10[%c0_21, %c0_22], %28 {strides = array<i32>} : memref<8x32xf32, #tpu.memory_space<vmem>>, vector<8x32xf32>,
    return
  }
  func.func @transform_0(%arg0: i32) -> (i32, i32) {
    %c0_i32 = arith.constant 0 : i32
    %c0_i32_0 = arith.constant 0 : i32
    return %arg0, %c0_i32 : i32, i32
  }
  func.func @transform_1(%arg0: i32) -> (i32, i32) {
    %c0_i32 = arith.constant 0 : i32
    %c0_i32_0 = arith.constant 0 : i32
    return %arg0, %c0_i32 : i32, i32
  }
  func.func @transform_2(%arg0: i32) -> (i32, i32) {
    %c0_i32 = arith.constant 0 : i32
    %c0_i32_0 = arith.constant 0 : i32
    return %arg0, %c0_i32 : i32, i32
  }
  func.func @transform_3(%arg0: i32) -> (i32, i32) {
    %c0_i32 = arith.constant 0 : i32
    %c0_i32_0 = arith.constant 0 : i32
    return %arg0, %c0_i32 : i32, i32
  }
  func.func @transform_4(%arg0: i32) -> (i32, i32) {
    %c0_i32 = arith.constant 0 : i32
    %c0_i32_0 = arith.constant 0 : i32
    %c0_i32_1 = arith.constant 0 : i32
    return %c0_i32, %c0_i32_0 : i32, i32
  }
  func.func @transform_5(%arg0: i32) -> (i32, i32) {
    %c0_i32 = arith.constant 0 : i32
    %c0_i32_0 = arith.constant 0 : i32
    %c0_i32_1 = arith.constant 0 : i32
    return %c0_i32, %c0_i32_0 : i32, i32
  }
  func.func @transform_6(%arg0: i32) -> (i32, i32) {
    %c0_i32 = arith.constant 0 : i32
    %c0_i32_0 = arith.constant 0 : i32
    %c0_i32_1 = arith.constant 0 : i32
    return %c0_i32, %c0_i32_0 : i32, i32
  }
  func.func @transform_7(%arg0: i32) -> (i32, i32) {
    %c0_i32 = arith.constant 0 : i32
    %c0_i32_0 = arith.constant 0 : i32
    %c0_i32_1 = arith.constant 0 : i32
    return %c0_i32, %c0_i32_0 : i32, i32
  }
  func.func @transform_8(%arg0: i32) -> (i32, i32) {
    %c0_i32 = arith.constant 0 : i32
    %c0_i32_0 = arith.constant 0 : i32
    %c0_i32_1 = arith.constant 0 : i32
    return %c0_i32, %c0_i32_0 : i32, i32
  }
  func.func @transform_9(%arg0: i32) -> (i32, i32) {
    %c0_i32 = arith.constant 0 : i32
    %c0_i32_0 = arith.constant 0 : i32
    return %arg0, %c0_i32 : i32, i32
  }
}

</mosaic_0001>

<llo_original>
// kernel: _rnn_update.1
$region0: #{_rnn_update.1}
  #allocation0 [shape = 'u32[]', space=smem, size = 0x4, offset = 0x4, fixed_abs, tag = 'smem constant byte address 0x4 - core index']
  #allocation1 [shape = 'u32[144,128]{1,0:T(1,128)}', space=vmem, size = 0x12000, scoped, tag = 'internal scratch']
  %s0 = inlined_call_operand.hbm [shape: f32[8,32], index: 0, kind: input, shape index: {}]
  %s1 = inlined_call_operand.hbm [shape: f32[8,7], index: 1, kind: input, shape index: {}]
  %s2 = inlined_call_operand.hbm [shape: f32[8,32], index: 2, kind: input, shape index: {}]
  %s3 = inlined_call_operand.vmem [shape: f32[8,1], index: 3, kind: input, shape index: {}]
  %s4 = inlined_call_operand.vmem [shape: f32[32,32], index: 4, kind: input, shape index: {}]
  %s5 = inlined_call_operand.hbm [shape: f32[7,32], index: 5, kind: input, shape index: {}]
  %s6 = inlined_call_operand.hbm [shape: f32[32,32], index: 6, kind: input, shape index: {}]
  %s7 = inlined_call_operand.vmem [shape: f32[1,32], index: 7, kind: input, shape index: {}]
  %s8 = inlined_call_operand.vmem [shape: f32[1,32], index: 8, kind: input, shape index: {}]
  %s9 = inlined_call_operand.hbm [shape: f32[8,32], index: 9, kind: output, shape index: {}]
  %s10 = sld [smem:[#allocation0]]
  $region66: #{_rnn_update.1} parent=0
    _
  %s12 = ssub.s32 1, %s10
  %s13 = scalar_select 0, %s12, %s10
  $region1: #{_rnn_update.1} parent=0
    #allocation2 [shape = 'u8[4096]{0}', space=vmem, size = 0x1000, scoped, tag = 'input window, operand 0, single buffered']
    #allocation3 [shape = 's32[1]{0}', space=sflag, size = 0x4, scoped, tag = 'scoped memory for _rnn_update.1']
    #allocation4 [shape = 's32[1]{0}', space=sflag, size = 0x4, scoped, tag = 'scoped memory for _rnn_update.1']
    #allocation5 [shape = 'u8[4096]{0}', space=vmem, size = 0x1000, scoped, tag = 'input window, operand 1, single buffered']
    #allocation6 [shape = 's32[1]{0}', space=sflag, size = 0x4, scoped, tag = 'scoped memory for _rnn_update.1']
    #allocation7 [shape = 'u8[4096]{0}', space=vmem, size = 0x1000, scoped, tag = 'input window, operand 2, single buffered']
    #allocation8 [shape = 'u8[4096]{0}', space=vmem, size = 0x1000, scoped, tag = 'input window, operand 5, single buffered']
    #allocation9 [shape = 's32[1]{0}', space=sflag, size = 0x4, scoped, tag = 'scoped memory for _rnn_update.1']
    #allocation10 [shape = 'u8[16384]{0}', space=vmem, size = 0x4000, scoped, tag = 'input window, operand 6, single buffered']
    #allocation11 [shape = 'u8[4096]{0}', space=vmem, size = 0x1000, scoped, tag = 'output window, operand 0, single buffered']
    %14 = vsyncpa [#allocation3], 0
    %15 = vsyncpa [#allocation6], 0
    %16 = vsyncpa [#allocation9], 0
    %17 = vsyncpa [#allocation4], 0
    // Predicated region
    $region2: #{_rnn_update.1} parent=1 // pred_check
      _
    $region3: #{_rnn_update.1} parent=1 // pred_check_branch
      %19 = sbr.rel (0) target = $region5
    $region4: #{_rnn_update.1} parent=1 // pred_region
      %s21 = ssub.s32 128, 128
      %22 = vsyncadd [#allocation3], %s21
      %s24 = sshll.u32 [#allocation2], 4
      %s25 = int_to_ptr.vmem [resolvable:$true] %s24
      %27 = dma.hbm_to_vmem [thread:$0]  %s0, 128, %s25, [#allocation3]
    $region5: #{_rnn_update.1} parent=1 // pred_fallthru
      _
    // Predicated region
    $region6: #{_rnn_update.1} parent=1 // pred_check
      _
    $region7: #{_rnn_update.1} parent=1 // pred_check_branch
      %29 = sbr.rel (0) target = $region9
    $region8: #{_rnn_update.1} parent=1 // pred_region
      %s31 = ssub.s32 128, 128
      %32 = vsyncadd [#allocation6], %s31
      %s34 = sshll.u32 [#allocation5], 4
      %s35 = int_to_ptr.vmem [resolvable:$true] %s34
      %37 = dma.hbm_to_vmem [thread:$0]  %s1, 128, %s35, [#allocation6]
    $region9: #{_rnn_update.1} parent=1 // pred_fallthru
      _
    // Predicated region
    $region10: #{_rnn_update.1} parent=1 // pred_check
      _
    $region11: #{_rnn_update.1} parent=1 // pred_check_branch
      %39 = sbr.rel (0) target = $region13
    $region12: #{_rnn_update.1} parent=1 // pred_region
      %s41 = ssub.s32 128, 128
      %42 = vsyncadd [#allocation6], %s41
      %s44 = sshll.u32 [#allocation7], 4
      %s45 = int_to_ptr.vmem [resolvable:$true] %s44
      %47 = dma.hbm_to_vmem [thread:$0]  %s2, 128, %s45, [#allocation6]
    $region13: #{_rnn_update.1} parent=1 // pred_fallthru
      _
    // Predicated region
    $region14: #{_rnn_update.1} parent=1 // pred_check
      _
    $region15: #{_rnn_update.1} parent=1 // pred_check_branch
      %49 = sbr.rel (0) target = $region17
    $region16: #{_rnn_update.1} parent=1 // pred_region
      _
    $region17: #{_rnn_update.1} parent=1 // pred_fallthru
      _
    // Predicated region
    $region18: #{_rnn_update.1} parent=1 // pred_check
      _
    $region19: #{_rnn_update.1} parent=1 // pred_check_branch
      %51 = sbr.rel (0) target = $region21
    $region20: #{_rnn_update.1} parent=1 // pred_region
      _
    $region21: #{_rnn_update.1} parent=1 // pred_fallthru
      _
    // Predicated region
    $region22: #{_rnn_update.1} parent=1 // pred_check
      _
    $region23: #{_rnn_update.1} parent=1 // pred_check_branch
      %53 = sbr.rel (0) target = $region25
    $region24: #{_rnn_update.1} parent=1 // pred_region
      %s55 = ssub.s32 128, 128
      %56 = vsyncadd [#allocation9], %s55
      %s58 = sshll.u32 [#allocation8], 4
      %s59 = int_to_ptr.vmem [resolvable:$true] %s58
      %61 = dma.hbm_to_vmem [thread:$0]  %s5, 128, %s59, [#allocation9]
    $region25: #{_rnn_update.1} parent=1 // pred_fallthru
      _
    // Predicated region
    $region26: #{_rnn_update.1} parent=1 // pred_check
      _
    $region27: #{_rnn_update.1} parent=1 // pred_check_branch
      %63 = sbr.rel (0) target = $region29
    $region28: #{_rnn_update.1} parent=1 // pred_region
      %s65 = ssub.s32 512, 512
      %66 = vsyncadd [#allocation9], %s65
      %s67 = sshll.u32 [#allocation10], 4
      %s68 = int_to_ptr.vmem [resolvable:$true] %s67
      %73 = dma.hbm_to_vmem [thread:$0]  %s6, 512, %s68, [#allocation9], 128, 128, 8
    $region29: #{_rnn_update.1} parent=1 // pred_fallthru
      _
    // Predicated region
    $region30: #{_rnn_update.1} parent=1 // pred_check
      _
    $region31: #{_rnn_update.1} parent=1 // pred_check_branch
      %75 = sbr.rel (0) target = $region33
    $region32: #{_rnn_update.1} parent=1 // pred_region
      _
    $region33: #{_rnn_update.1} parent=1 // pred_fallthru
      _
    // Predicated region
    $region34: #{_rnn_update.1} parent=1 // pred_check
      _
    $region35: #{_rnn_update.1} parent=1 // pred_check_branch
      %77 = sbr.rel (0) target = $region37
    $region36: #{_rnn_update.1} parent=1 // pred_region
      _
    $region37: #{_rnn_update.1} parent=1 // pred_fallthru
      _
    // Predicated region
    $region38: #{_rnn_update.1} parent=1 // pred_check
      _
    $region39: #{_rnn_update.1} parent=1 // pred_check_branch
      %79 = sbr.rel (0) target = $region41
    $region40: #{_rnn_update.1} parent=1 // pred_region
      %80 = dma.done [#allocation3], 128
    $region41: #{_rnn_update.1} parent=1 // pred_fallthru
      _
    // Predicated region
    $region42: #{_rnn_update.1} parent=1 // pred_check
      _
    $region43: #{_rnn_update.1} parent=1 // pred_check_branch
      %82 = sbr.rel (0) target = $region45
    $region44: #{_rnn_update.1} parent=1 // pred_region
      %83 = dma.done [#allocation6], 128
    $region45: #{_rnn_update.1} parent=1 // pred_fallthru
      _
    // Predicated region
    $region46: #{_rnn_update.1} parent=1 // pred_check
      _
    $region47: #{_rnn_update.1} parent=1 // pred_check_branch
      %85 = sbr.rel (0) target = $region49
    $region48: #{_rnn_update.1} parent=1 // pred_region
      %86 = dma.done [#allocation6], 128
    $region49: #{_rnn_update.1} parent=1 // pred_fallthru
      _
    // Predicated region
    $region50: #{_rnn_update.1} parent=1 // pred_check
      _
    $region51: #{_rnn_update.1} parent=1 // pred_check_branch
      %88 = sbr.rel (0) target = $region53
    $region52: #{_rnn_update.1} parent=1 // pred_region
      %89 = dma.done [#allocation9], 128
    $region53: #{_rnn_update.1} parent=1 // pred_fallthru
      _
    // Predicated region
    $region54: #{_rnn_update.1} parent=1 // pred_check
      _
    $region55: #{_rnn_update.1} parent=1 // pred_check_branch
      %91 = sbr.rel (0) target = $region57
    $region56: #{_rnn_update.1} parent=1 // pred_region
      %92 = dma.done [#allocation9], 512
    $region57: #{_rnn_update.1} parent=1 // pred_fallthru
      _
    %v93 = vld [vmem:[#allocation2] sm:$0xff]
    %v94 = vld [vmem:[%s4] sm:$0xff]
    %v95 = vld [vmem:[%s4 + $0x8] sm:$0xff]
    %v96 = vld [vmem:[%s4 + $0x10] sm:$0xff]
    %v97 = vld [vmem:[%s4 + $0x18] sm:$0xff]
    %v98 = vld [vmem:[#allocation5] sm:$0xff]
    %v99 = vld [vmem:[#allocation8] sm:$0x7f]
    %vm100 = vcmask 56320
    %v102 = vsel %vm100, %v98, 0
    %vm104 = vcmask 1046528
    %v106 = vsel %vm104, %v99, 0
    %108 = vmatprep.subr.mxu0 0.0
    %109 = vmatpush1.msra.mxu0 %v106
    %110 = vmatprep.subr.mxu0 0.0
    %111 = vmatpush1.msra.mxu0 0.0
    %112 = vmatprep.subr.mxu0 0.0
    %113 = vmatpush1.msra.mxu0 0.0
    %114 = vmatprep.subr.mxu0 0.0
    %115 = vmatpush1.msra.mxu0 0.0
    %116 = vmatprep.subr.mxu0 0.0
    %117 = vmatpush1.msra.mxu0 0.0
    %118 = vmatprep.subr.mxu0 0.0
    %119 = vmatpush1.msra.mxu0 0.0
    %120 = vmatprep.subr.mxu0 0.0
    %121 = vmatpush1.msra.mxu0 0.0
    %122 = vmatprep.subr.mxu0 0.0
    %123 = vmatpush1.msra.mxu0 0.0
    %124 = vmatprep.subr.mxu0 0.0
    %125 = vmatpush1.msra.mxu0 0.0
    %126 = vmatprep.subr.mxu0 0.0
    %127 = vmatpush1.msra.mxu0 0.0
    %128 = vmatprep.subr.mxu0 0.0
    %129 = vmatpush1.msra.mxu0 0.0
    %130 = vmatprep.subr.mxu0 0.0
    %131 = vmatpush1.msra.mxu0 0.0
    %132 = vmatprep.subr.mxu0 0.0
    %133 = vmatpush1.msra.mxu0 0.0
    %134 = vmatprep.subr.mxu0 0.0
    %135 = vmatpush1.msra.mxu0 0.0
    %136 = vmatprep.subr.mxu0 0.0
    %137 = vmatpush1.msra.mxu0 0.0
    %138 = vmatprep.subr.mxu0 0.0
    %139 = vmatpush1.msra.mxu0 0.0
    %140 = vmatprep.subr.mxu0 0.0
    %141 = vmatpush1.msra.mxu0 0.0
    %142 = vmatprep.subr.mxu0 0.0
    %143 = vmatpush1.msra.mxu0 0.0
    %144 = vmatprep.subr.mxu0 0.0
    %145 = vmatpush1.msra.mxu0 0.0
    %146 = vmatprep.subr.mxu0 0.0
    %147 = vmatpush1.msra.mxu0 0.0
    %148 = vmatprep.subr.mxu0 0.0
    %149 = vmatpush1.msra.mxu0 0.0
    %150 = vmatprep.subr.mxu0 0.0
    %151 = vmatpush1.msra.mxu0 0.0
    %152 = vmatprep.subr.mxu0 0.0
    %153 = vmatpush1.msra.mxu0 0.0
    %154 = vmatprep.subr.mxu0 0.0
    %155 = vmatpush1.msra.mxu0 0.0
    %156 = vmatprep.subr.mxu0 0.0
    %157 = vmatpush1.msra.mxu0 0.0
    %158 = vmatprep.subr.mxu0 0.0
    %159 = vmatpush1.msra.mxu0 0.0
    %160 = vmatprep.subr.mxu0 0.0
    %161 = vmatpush1.msra.mxu0 0.0
    %162 = vmatprep.subr.mxu0 0.0
    %163 = vmatpush1.msra.mxu0 0.0
    %164 = vmatprep.subr.mxu0 0.0
    %165 = vmatpush1.msra.mxu0 0.0
    %166 = vmatprep.subr.mxu0 0.0
    %167 = vmatpush1.msra.mxu0 0.0
    %168 = vmatprep.subr.mxu0 0.0
    %169 = vmatpush1.msra.mxu0 0.0
    %170 = vmatprep.subr.mxu0 0.0
    %171 = vmatpush1.msra.mxu0 0.0
    %172 = vmatprep.mubr.f32.mxu0 0.0
    %173 = vmatmul.mubr.f32.gmra.mrb[0].mxu0 %v102
    %v174 = vpop.f32.mrb[0].mxu0
    %v175 = vadd.f32 0.0, %v174
    %v176 = vpop.f32.mrb[0].mxu0
    %177 = vdwg.mxu0
    %vm178 = vcmask 261120
    %v180 = vsel %vm178, %v93, 0
    %182 = vmatprep.subr.mxu0 0.0
    %183 = vmatpush1.msra.mxu0 %v94
    %184 = vmatprep.subr.mxu0 0.0
    %185 = vmatpush1.msra.mxu0 %v95
    %186 = vmatprep.subr.mxu0 0.0
    %187 = vmatpush1.msra.mxu0 %v96
    %188 = vmatprep.subr.mxu0 0.0
    %189 = vmatpush1.msra.mxu0 %v97
    %190 = vmatprep.subr.mxu0 0.0
    %191 = vmatpush1.msra.mxu0 0.0
    %192 = vmatprep.subr.mxu0 0.0
    %193 = vmatpush1.msra.mxu0 0.0
    %194 = vmatprep.subr.mxu0 0.0
    %195 = vmatpush1.msra.mxu0 0.0
    %196 = vmatprep.subr.mxu0 0.0
    %197 = vmatpush1.msra.mxu0 0.0
    %198 = vmatprep.subr.mxu0 0.0
    %199 = vmatpush1.msra.mxu0 0.0
    %200 = vmatprep.subr.mxu0 0.0
    %201 = vmatpush1.msra.mxu0 0.0
    %202 = vmatprep.subr.mxu0 0.0
    %203 = vmatpush1.msra.mxu0 0.0
    %204 = vmatprep.subr.mxu0 0.0
    %205 = vmatpush1.msra.mxu0 0.0
    %206 = vmatprep.subr.mxu0 0.0
    %207 = vmatpush1.msra.mxu0 0.0
    %208 = vmatprep.subr.mxu0 0.0
    %209 = vmatpush1.msra.mxu0 0.0
    %210 = vmatprep.subr.mxu0 0.0
    %211 = vmatpush1.msra.mxu0 0.0
    %212 = vmatprep.subr.mxu0 0.0
    %213 = vmatpush1.msra.mxu0 0.0
    %214 = vmatprep.subr.mxu0 0.0
    %215 = vmatpush1.msra.mxu0 0.0
    %216 = vmatprep.subr.mxu0 0.0
    %217 = vmatpush1.msra.mxu0 0.0
    %218 = vmatprep.subr.mxu0 0.0
    %219 = vmatpush1.msra.mxu0 0.0
    %220 = vmatprep.subr.mxu0 0.0
    %221 = vmatpush1.msra.mxu0 0.0
    %222 = vmatprep.subr.mxu0 0.0
    %223 = vmatpush1.msra.mxu0 0.0
    %224 = vmatprep.subr.mxu0 0.0
    %225 = vmatpush1.msra.mxu0 0.0
    %226 = vmatprep.subr.mxu0 0.0
    %227 = vmatpush1.msra.mxu0 0.0
    %228 = vmatprep.subr.mxu0 0.0
    %229 = vmatpush1.msra.mxu0 0.0
    %230 = vmatprep.subr.mxu0 0.0
    %231 = vmatpush1.msra.mxu0 0.0
    %232 = vmatprep.subr.mxu0 0.0
    %233 = vmatpush1.msra.mxu0 0.0
    %234 = vmatprep.subr.mxu0 0.0
    %235 = vmatpush1.msra.mxu0 0.0
    %236 = vmatprep.subr.mxu0 0.0
    %237 = vmatpush1.msra.mxu0 0.0
    %238 = vmatprep.subr.mxu0 0.0
    %239 = vmatpush1.msra.mxu0 0.0
    %240 = vmatprep.subr.mxu0 0.0
    %241 = vmatpush1.msra.mxu0 0.0
    %242 = vmatprep.subr.mxu0 0.0
    %243 = vmatpush1.msra.mxu0 0.0
    %244 = vmatprep.subr.mxu0 0.0
    %245 = vmatpush1.msra.mxu0 0.0
    %246 = vmatprep.mubr.f32.mxu0 0.0
    %247 = vmatmul.mubr.f32.gmra.mrb[0].mxu0 %v180
    %v248 = vpop.f32.mrb[0].mxu0
    %v249 = vadd.f32 %v175, %v248
    %v250 = vpop.f32.mrb[0].mxu0
    %251 = vdwg.mxu0
    %v252 = vld [vmem:[#allocation7] sm:$0xff]
    %v253 = vld [vmem:[#allocation10] sm:$0xff]
    %v254 = vld [vmem:[#allocation10 + $0x8] sm:$0xff]
    %v255 = vld [vmem:[#allocation10 + $0x10] sm:$0xff]
    %v256 = vld [vmem:[#allocation10 + $0x18] sm:$0xff]
    %v258 = vsel %vm178, %v252, 0
    %260 = vmatprep.subr.mxu0 0.0
    %261 = vmatpush1.msra.mxu0 %v253
    %262 = vmatprep.subr.mxu0 0.0
    %263 = vmatpush1.msra.mxu0 %v254
    %264 = vmatprep.subr.mxu0 0.0
    %265 = vmatpush1.msra.mxu0 %v255
    %266 = vmatprep.subr.mxu0 0.0
    %267 = vmatpush1.msra.mxu0 %v256
    %268 = vmatprep.subr.mxu0 0.0
    %269 = vmatpush1.msra.mxu0 0.0
    %270 = vmatprep.subr.mxu0 0.0
    %271 = vmatpush1.msra.mxu0 0.0
    %272 = vmatprep.subr.mxu0 0.0
    %273 = vmatpush1.msra.mxu0 0.0
    %274 = vmatprep.subr.mxu0 0.0
    %275 = vmatpush1.msra.mxu0 0.0
    %276 = vmatprep.subr.mxu0 0.0
    %277 = vmatpush1.msra.mxu0 0.0
    %278 = vmatprep.subr.mxu0 0.0
    %279 = vmatpush1.msra.mxu0 0.0
    %280 = vmatprep.subr.mxu0 0.0
    %281 = vmatpush1.msra.mxu0 0.0
    %282 = vmatprep.subr.mxu0 0.0
    %283 = vmatpush1.msra.mxu0 0.0
    %284 = vmatprep.subr.mxu0 0.0
    %285 = vmatpush1.msra.mxu0 0.0
    %286 = vmatprep.subr.mxu0 0.0
    %287 = vmatpush1.msra.mxu0 0.0
    %288 = vmatprep.subr.mxu0 0.0
    %289 = vmatpush1.msra.mxu0 0.0
    %290 = vmatprep.subr.mxu0 0.0
    %291 = vmatpush1.msra.mxu0 0.0
    %292 = vmatprep.subr.mxu0 0.0
    %293 = vmatpush1.msra.mxu0 0.0
    %294 = vmatprep.subr.mxu0 0.0
    %295 = vmatpush1.msra.mxu0 0.0
    %296 = vmatprep.subr.mxu0 0.0
    %297 = vmatpush1.msra.mxu0 0.0
    %298 = vmatprep.subr.mxu0 0.0
    %299 = vmatpush1.msra.mxu0 0.0
    %300 = vmatprep.subr.mxu0 0.0
    %301 = vmatpush1.msra.mxu0 0.0
    %302 = vmatprep.subr.mxu0 0.0
    %303 = vmatpush1.msra.mxu0 0.0
    %304 = vmatprep.subr.mxu0 0.0
    %305 = vmatpush1.msra.mxu0 0.0
    %306 = vmatprep.subr.mxu0 0.0
    %307 = vmatpush1.msra.mxu0 0.0
    %308 = vmatprep.subr.mxu0 0.0
    %309 = vmatpush1.msra.mxu0 0.0
    %310 = vmatprep.subr.mxu0 0.0
    %311 = vmatpush1.msra.mxu0 0.0
    %312 = vmatprep.subr.mxu0 0.0
    %313 = vmatpush1.msra.mxu0 0.0
    %314 = vmatprep.subr.mxu0 0.0
    %315 = vmatpush1.msra.mxu0 0.0
    %316 = vmatprep.subr.mxu0 0.0
    %317 = vmatpush1.msra.mxu0 0.0
    %318 = vmatprep.subr.mxu0 0.0
    %319 = vmatpush1.msra.mxu0 0.0
    %320 = vmatprep.subr.mxu0 0.0
    %321 = vmatpush1.msra.mxu0 0.0
    %322 = vmatprep.subr.mxu0 0.0
    %323 = vmatpush1.msra.mxu0 0.0
    %324 = vmatprep.mubr.f32.mxu0 0.0
    %325 = vmatmul.mubr.f32.gmra.mrb[0].mxu0 %v258
    %v326 = vpop.f32.mrb[0].mxu0
    %v327 = vadd.f32 0.0, %v326
    %v328 = vpop.f32.mrb[0].mxu0
    %329 = vdwg.mxu0
    %v330 = vadd.f32 %v249, %v327
    %v331 = vld [vmem:[%s3] sm:$0xff]
    %v332 = vld [vmem:[%s7] sm:$0x1]
    %334 = vset.pattern.permute.xlu0 0
    %335 = vperm.xlu0 %334, %v331
    %v336 = vpop.permute.xlu0 %335
    %v339 = vlaneseq
    %v340 = vshrl.u32 %v339, 7
    %v341 = vsub.s32 0, %v340
    %v342 = vrot.slane %v332, %v341
    %v344 = vmul.f32 %v336, %v342
    %v345 = vadd.f32 %v330, %v344
    %v346 = vld [vmem:[%s8] sm:$0x1]
    %v348 = vlaneseq
    %v349 = vshrl.u32 %v348, 7
    %v350 = vsub.s32 0, %v349
    %v351 = vrot.slane %v346, %v350
    %v353 = vadd.f32 %v345, %v351
    %v354 = vtanh.pop %v353
    %v355 = vmul.f32 %v354, %v354
    %v356 = vsel %vm178, %v355, 0.0
    %357 = vadd.xlane.f32.xlu0 %v356
    %v358 = vpop.xlane.xlu0 %357
    %v359 = vmax.f32 %v358, 1e-24
    %v360 = vrsqrt.pop %v359
    %v361 = vmul.f32 %v354, %v360
    %362 = vst.msk [vmem:[#allocation11] sm:$0xff] %vm178, %v361
    // Predicated region
    $region58: #{_rnn_update.1} parent=1 // pred_check
      _
    $region59: #{_rnn_update.1} parent=1 // pred_check_branch
      %364 = sbr.rel (0) target = $region61
    $region60: #{_rnn_update.1} parent=1 // pred_region
      %s366 = ssub.s32 128, 128
      %367 = vsyncadd [#allocation4], %s366
      %s369 = sshll.u32 [#allocation11], 4
      %s370 = int_to_ptr.vmem [resolvable:$true] %s369
      %372 = dma.vmem_to_hbm [thread:$0]  %s370, 128, %s9, [#allocation4]
    $region61: #{_rnn_update.1} parent=1 // pred_fallthru
      _
    // Predicated region
    $region62: #{_rnn_update.1} parent=1 // pred_check
      _
    $region63: #{_rnn_update.1} parent=1 // pred_check_branch
      %374 = sbr.rel (0) target = $region65
    $region64: #{_rnn_update.1} parent=1 // pred_region
      %375 = dma.done [#allocation4], 128
    $region65: #{_rnn_update.1} parent=1 // pred_fallthru
      _
    %376 = vsyncpa [#allocation3], 1
    %377 = vsyncpa [#allocation6], 1
    %378 = vsyncpa [#allocation9], 1
    %379 = vsyncpa [#allocation4], 1

</llo_original>
